<compile_context>
chip_gen: v5e
topology: v5e:2x2
jax: 0.10.0
libtpu: 0.0.40
codegen_flags: <defaults>
</compile_context>

<pallas_src>
import math

import jax
import jax.numpy as jnp
from jax.experimental import pallas as pl
from jax.experimental.pallas import tpu as pltpu


def _critic_kernel(s_ref, a_ref, w1s_ref, w1a_ref, b1_ref, w2_ref, b2_ref,
                   w3_ref, b3_ref, o_ref):
    # s:  (TB, S)       a:  (TB, A)       (input dtype; cast to compute dtype here)
    # w1_s: (S, H)      w1_a: (A, H)      b1: (1, H) f32
    # w2: (H, H)        b2: (1, H) f32
    # w3: (1, H)        b3: (1, 1) f32 scalar in SMEM
    # o:  (1, TB) f32   (lane-dense row; wrapper reshapes to (B, 1))
    cd = w2_ref.dtype
    s = s_ref[...].astype(cd)
    a = a_ref[...].astype(cd)

    # Layer 1 (concat fused as a split matmul): state@w1_s + action@w1_a + b1
    h1 = jnp.dot(s, w1s_ref[...], preferred_element_type=jnp.float32)
    h1 = h1 + jnp.dot(a, w1a_ref[...], preferred_element_type=jnp.float32)
    h1 = jnp.maximum(h1 + b1_ref[...], 0.0).astype(cd)            # F.relu (f32 elementwise)

    # Layer 2
    h2 = jnp.dot(h1, w2_ref[...], preferred_element_type=jnp.float32)
    h2 = jnp.maximum(h2 + b2_ref[...], 0.0)                       # F.relu (f32)

    # Output layer, lane-dense: contract w3 (1,H) with h2 (TB,H) over H
    # ("NT" dim numbers, trans-b matmul) -> (1, TB) row straight off the MXU,
    # so the store is an unmasked lane-dense vst (no (TB,1) masked column).
    q_row = jax.lax.dot_general(
        w3_ref[...], h2.astype(cd),
        dimension_numbers=(((1,), (1,)), ((), ())),
        preferred_element_type=jnp.float32)                       # (1, TB)
    o_ref[...] = (q_row + b3_ref[0, 0]).astype(o_ref.dtype)


def _round_up(x, m):
    return ((x + m - 1) // m) * m


def _const_spec(shape, single_buffer):
    """BlockSpec for a weight/bias that stays resident (constant index_map)."""
    idx = lambda i, _n=len(shape): (0,) * _n
    if single_buffer:
        # Block never changes -> no need for a second (double) buffer in VMEM.
        return pl.BlockSpec(shape, idx, pipeline_mode=pl.Buffered(1))
    return pl.BlockSpec(shape, idx)


def critic_forward(state, action, params, *, batch_tile=2048):
    """Pallas implementation of CriticNetwork.forward.

    `params` should be the output of prepare_critic_params (weights already in
    the desired compute dtype, biases f32) so no per-call weight casts happen.
    """
    B, state_dim = state.shape
    action_dim = action.shape[1]
    w1_s, w1_a = params["w1_s"], params["w1_a"]
    w2, w3 = params["w2"], params["w3"]
    b1, b2, b3 = params["b1"], params["b2"], params["b3"]
    H = w2.shape[0]
    cd = w2.dtype                                   # compute dtype from prepared params

    # ---- batch-tile selection -------------------------------------------
    batch_tile = max(8, (batch_tile // 8) * 8)
    # v5e scoped-VMEM default is 16 MiB; dominant temporaries are the f32
    # h1/h2 tiles (+ their bf16 casts) ~= 12 * tb * H bytes. Keep them (plus
    # double-buffered input tiles) comfortably under budget.
    vmem_budget = 10 * 1024 * 1024
    tb_cap = max(8, ((vmem_budget // (12 * H)) // 8) * 8)
    if B <= 2 * batch_tile:
        # ~B/2 per tile -> >=2 grid tiles so the "parallel" axis can use both
        # TensorCores on v7x (no effect on single-TC v5e/v6e).
        tb = _round_up(pl.cdiv(B, 2), 8)
    else:
        tb = batch_tile
    tb = min(tb, tb_cap)
    if tb >= B:
        tb = B                                      # full-extent block (always legal)
    grid_n = pl.cdiv(B, tb)

    itemsize = jnp.dtype(cd).itemsize
    flops = 2 * B * ((state_dim + action_dim) * H + H * H + H)
    bytes_accessed = (
        B * (state_dim + action_dim) * jnp.dtype(state.dtype).itemsize  # activations in
        + ((state_dim + action_dim) * H + H * H + H) * itemsize         # weights
        + (2 * H + 1) * 4                                               # f32 biases
        + grid_n * tb * 4)                                              # f32 output

    def _call(single_buffer_weights):
        in_specs = [
            pl.BlockSpec((tb, state_dim), lambda i: (i, 0)),    # state tile
            pl.BlockSpec((tb, action_dim), lambda i: (i, 0)),   # action tile
            _const_spec((state_dim, H), single_buffer_weights),   # w1_s (resident)
            _const_spec((action_dim, H), single_buffer_weights),  # w1_a (resident)
            _const_spec((1, H), single_buffer_weights),           # b1
            _const_spec((H, H), single_buffer_weights),           # w2 (resident)
            _const_spec((1, H), single_buffer_weights),           # b2
            _const_spec((1, H), single_buffer_weights),           # w3 row
            pl.BlockSpec(memory_space=pltpu.MemorySpace.SMEM),    # b3 scalar
        ]
        return pl.pallas_call(
            _critic_kernel,
            out_shape=jax.ShapeDtypeStruct((grid_n, tb), jnp.float32),
            grid=(grid_n,),
            in_specs=in_specs,
            out_specs=pl.BlockSpec((1, tb), lambda i: (i, 0)),   # lane-dense Q row
            compiler_params=pltpu.CompilerParams(
                dimension_semantics=("parallel",),               # 2 TCs on v7x
            ),
            cost_estimate=pl.CostEstimate(
                flops=flops, transcendentals=0, bytes_accessed=bytes_accessed),
        )(state, action, w1_s, w1_a, b1, w2, b2, w3, b3)

    try:
        out2d = _call(True)
    except Exception:
        # pl.Buffered(1) not accepted by this jax version -> default buffering.
        out2d = _call(False)

    # (grid_n, tb) row-major == batch order; drop the padded tail of the last tile.
    return out2d.reshape(-1)[:B].reshape(B, 1)


def prepare_critic_params(params, compute_dtype=jnp.bfloat16):
    """Cast weights ONCE (at init / after each optimizer step), biases stay f32.

    Hoists the per-forward-call weight casts out of the RL inner loop.
    """
    cd = compute_dtype
    return {
        "w1_s": params["w1_s"].astype(cd),
        "w1_a": params["w1_a"].astype(cd),
        "w2": params["w2"].astype(cd),
        "w3": params["w3"].astype(cd),
        "b1": params["b1"].astype(jnp.float32),
        "b2": params["b2"].astype(jnp.float32),
        "b3": params["b3"].astype(jnp.float32),
    }


def init_critic_params(key, state_dim, action_dim, hidden_dim=256, init_w=0.003):
    """Deterministic init mimicking nn.Linear defaults + uniform output layer."""
    in_dim = state_dim + action_dim
    k1, k2, k3, k4, k5, k6 = jax.random.split(key, 6)

    def linear_init(kw, kb, fan_in, fan_out):
        bound = 1.0 / math.sqrt(fan_in)
        w = jax.random.uniform(kw, (fan_in, fan_out), jnp.float32, -bound, bound)
        b = jax.random.uniform(kb, (1, fan_out), jnp.float32, -bound, bound)
        return w, b

    w1, b1 = linear_init(k1, k2, in_dim, hidden_dim)
    w2, b2 = linear_init(k3, k4, hidden_dim, hidden_dim)
    # output_layer: uniform_(-init_w, init_w) for both weight and bias
    w3 = jax.random.uniform(k5, (1, hidden_dim), jnp.float32, -init_w, init_w)
    b3 = jax.random.uniform(k6, (1, 1), jnp.float32, -init_w, init_w)
    return {
        "w1_s": w1[:state_dim],      # concat fused -> split first-layer weight
        "w1_a": w1[state_dim:],
        "b1": b1, "w2": w2, "b2": b2, "w3": w3, "b3": b3,
    }


def critic_reference(state, action, params):
    """Pure-JAX fp32 reference (matches the PyTorch forward)."""
    x = jnp.concatenate([state, action], axis=1).astype(jnp.float32)
    w1 = jnp.concatenate([params["w1_s"], params["w1_a"]], axis=0)
    h1 = jax.nn.relu(x @ w1 + params["b1"])
    h2 = jax.nn.relu(h1 @ params["w2"] + params["b2"])
    return h2 @ params["w3"].T + params["b3"]


if __name__ == "__main__":
    key = jax.random.PRNGKey(0)
    k_params, k_state, k_action = jax.random.split(key, 3)

    batch = 8
    state_dim = 16
    action_dim = 8
    hidden_dim = 32   # small demo config; use a multiple of 128 (e.g. 256) for perf

    params = init_critic_params(k_params, state_dim, action_dim, hidden_dim)
    state = jax.random.normal(k_state, (batch, state_dim), jnp.float32)
    action = jax.random.normal(k_action, (batch, action_dim), jnp.float32)

    q_ref = critic_reference(state, action, params)

    # fp32 path: check against the JAX reference.
    params_f32 = prepare_critic_params(params, jnp.float32)
    q_f32 = critic_forward(state, action, params_f32)
    jax.block_until_ready(q_f32)
    assert q_f32.shape == (batch, 1), q_f32.shape
    assert jnp.allclose(q_f32, q_ref, atol=2e-3, rtol=2e-3), "fp32 mismatch"

    # bf16 path (perf default): f32 accumulation, loosened tolerance.
    params_bf16 = prepare_critic_params(params, jnp.bfloat16)
    q_bf16 = critic_forward(state, action, params_bf16)
    jax.block_until_ready(q_bf16)
    assert q_bf16.shape == (batch, 1), q_bf16.shape
    assert jnp.allclose(q_bf16, q_ref, atol=3e-2, rtol=3e-2), "bf16 mismatch"

    # Ragged multi-tile path (B % tb != 0, grid > 1) exercised at small size.
    k2s, k2a = jax.random.split(jax.random.PRNGKey(1))
    B2 = 50
    state2 = jax.random.normal(k2s, (B2, state_dim), jnp.float32)
    action2 = jax.random.normal(k2a, (B2, action_dim), jnp.float32)
    q2 = critic_forward(state2, action2, params_f32, batch_tile=16)
    jax.block_until_ready(q2)
    q2_ref = critic_reference(state2, action2, params)
    assert q2.shape == (B2, 1), q2.shape
    assert jnp.allclose(q2, q2_ref, atol=2e-3, rtol=2e-3), "ragged-tile mismatch"

    print("KERNEL_OK")
</pallas_src>

<mosaic_0001>
module attributes {stable_mosaic.version = 11 : i64} {
  func.func @_critic_kernel(%arg0: i32, %arg1: memref<8x16xf32, #tpu.memory_space<vmem>>, %arg2: memref<8x8xf32, #tpu.memory_space<vmem>>, %arg3: memref<16x32xf32, #tpu.memory_space<vmem>>, %arg4: memref<8x32xf32, #tpu.memory_space<vmem>>, %arg5: memref<1x32xf32, #tpu.memory_space<vmem>>, %arg6: memref<32x32xf32, #tpu.memory_space<vmem>>, %arg7: memref<1x32xf32, #tpu.memory_space<vmem>>, %arg8: memref<1x32xf32, #tpu.memory_space<vmem>>, %arg9: memref<1x1xf32, #tpu.memory_space<smem>>, %arg10: memref<1x8xf32, #tpu.memory_space<vmem>>) attributes {dimension_semantics = [#tpu.dimension_semantics<parallel>], iteration_bounds = array<i64: 1>, scalar_prefetch = 0 : i64, scratch_operands = 0 : i64, tpu.core_type = #tpu.core_type<tc>, window_params = [{transform_indices = @transform_0, window_bounds = array<i64: 8, 16>}, {transform_indices = @transform_1, window_bounds = array<i64: 8, 8>}, {pipeline_mode = #tpu.pipeline_mode<synchronous>, transform_indices = @transform_2, window_bounds = array<i64: 16, 32>}, {pipeline_mode = #tpu.pipeline_mode<synchronous>, transform_indices = @transform_3, window_bounds = array<i64: 8, 32>}, {pipeline_mode = #tpu.pipeline_mode<synchronous>, transform_indices = @transform_4, window_bounds = array<i64: 1, 32>}, {pipeline_mode = #tpu.pipeline_mode<synchronous>, transform_indices = @transform_5, window_bounds = array<i64: 32, 32>}, {pipeline_mode = #tpu.pipeline_mode<synchronous>, transform_indices = @transform_6, window_bounds = array<i64: 1, 32>}, {pipeline_mode = #tpu.pipeline_mode<synchronous>, transform_indices = @transform_7, window_bounds = array<i64: 1, 32>}, {transform_indices = @transform_8, window_bounds = array<i64: 1, 1>}, {transform_indices = @transform_9, window_bounds = array<i64: 1, 8>}]} {
    %c0 = arith.constant 0 : index
    %c0_0 = arith.constant 0 : index
    %0 = vector.load %arg1[%c0, %c0_0] : memref<8x16xf32, #tpu.memory_space<vmem>>, vector<8x16xf32>
    %c0_1 = arith.constant 0 : index
    %c0_2 = arith.constant 0 : index
    %1 = vector.load %arg2[%c0_1, %c0_2] : memref<8x8xf32, #tpu.memory_space<vmem>>, vector<8x8xf32>
    %c0_3 = arith.constant 0 : index
    %c0_4 = arith.constant 0 : index
    %2 = vector.load %arg3[%c0_3, %c0_4] : memref<16x32xf32, #tpu.memory_space<vmem>>, vector<16x32xf32>
    %cst = arith.constant dense<0.000000e+00> : vector<8x32xf32>
    %3 = tpu.matmul %0, %2, %cst {dimension_numbers = #tpu.dot_dimension_numbers<[1], [0], [0], [1], [0, 0, 1, 1], [], []>} : vector<8x16xf32>, vector<16x32xf32>, vector<8x32xf32> -> vector<8x32xf32>
    %c0_5 = arith.constant 0 : index
    %c0_6 = arith.constant 0 : index
    %4 = vector.load %arg4[%c0_5, %c0_6] : memref<8x32xf32, #tpu.memory_space<vmem>>, vector<8x32xf32>
    %cst_7 = arith.constant dense<0.000000e+00> : vector<8x32xf32>
    %5 = tpu.matmul %1, %4, %cst_7 {dimension_numbers = #tpu.dot_dimension_numbers<[1], [0], [0], [1], [0, 0, 1, 1], [], []>} : vector<8x8xf32>, vector<8x32xf32>, vector<8x32xf32> -> vector<8x32xf32>
    %6 = arith.addf %3, %5 : vector<8x32xf32>
    %c0_8 = arith.constant 0 : index
    %c0_9 = arith.constant 0 : index
    %7 = vector.load %arg5[%c0_8, %c0_9] : memref<1x32xf32, #tpu.memory_space<vmem>>, vector<1x32xf32>
    %8 = vector.broadcast %7 : vector<1x32xf32> to vector<8x32xf32>
    %9 = arith.addf %6, %8 : vector<8x32xf32>
    %cst_10 = arith.constant 0.000000e+00 : f32
    %10 = vector.broadcast %cst_10 : f32 to vector<8x32xf32>
    %11 = arith.maximumf %9, %10 : vector<8x32xf32>
    %c0_11 = arith.constant 0 : index
    %c0_12 = arith.constant 0 : index
    %12 = vector.load %arg6[%c0_11, %c0_12] : memref<32x32xf32, #tpu.memory_space<vmem>>, vector<32x32xf32>
    %cst_13 = arith.constant dense<0.000000e+00> : vector<8x32xf32>
    %13 = tpu.matmul %11, %12, %cst_13 {dimension_numbers = #tpu.dot_dimension_numbers<[1], [0], [0], [1], [0, 0, 1, 1], [], []>} : vector<8x32xf32>, vector<32x32xf32>, vector<8x32xf32> -> vector<8x32xf32>
    %c0_14 = arith.constant 0 : index
    %c0_15 = arith.constant 0 : index
    %14 = vector.load %arg7[%c0_14, %c0_15] : memref<1x32xf32, #tpu.memory_space<vmem>>, vector<1x32xf32>
    %15 = vector.broadcast %14 : vector<1x32xf32> to vector<8x32xf32>
    %16 = arith.addf %13, %15 : vector<8x32xf32>
    %cst_16 = arith.constant 0.000000e+00 : f32
    %17 = vector.broadcast %cst_16 : f32 to vector<8x32xf32>
    %18 = arith.maximumf %16, %17 : vector<8x32xf32>
    %c0_17 = arith.constant 0 : index
    %c0_18 = arith.constant 0 : index
    %19 = vector.load %arg8[%c0_17, %c0_18] : memref<1x32xf32, #tpu.memory_space<vmem>>, vector<1x32xf32>
    %cst_19 = arith.constant dense<0.000000e+00> : vector<1x8xf32>
    %20 = tpu.matmul %19, %18, %cst_19 {dimension_numbers = #tpu.dot_dimension_numbers<[1], [1], [0], [0], [0, 0, 1, 0], [], []>} : vector<1x32xf32>, vector<8x32xf32>, vector<1x8xf32> -> vector<1x8xf32>
    %c0_20 = arith.constant 0 : index
    %c0_21 = arith.constant 0 : index
    %21 = memref.load %arg9[%c0_20, %c0_21] : memref<1x1xf32, #tpu.memory_space<smem>>
    %22 = vector.broadcast %21 : f32 to vector<1x8xf32>
    %23 = arith.addf %20, %22 : vector<1x8xf32>
    %c0_22 = arith.constant 0 : index
    %c0_23 = arith.constant 0 : index
    %24 = vector.load %arg10[%c0_22, %c0_23] : memref<1x8xf32, #tpu.memory_space<vmem>>, vector<1x8xf32>
    tpu.vector_store %arg10[%c0_22, %c0_23], %23 {strides = array<i32>} : memref<1x8xf32, #tpu.memory_space<vmem>>, vector<1x8xf32>,
    return
  }
  func.func @transform_0(%arg0: i32) -> (i32, i32) {
    %c0_i32 = arith.constant 0 : i32
    %c0_i32_0 = arith.constant 0 : i32
    return %arg0, %c0_i32 : i32, i32
  }
  func.func @transform_1(%arg0: i32) -> (i32, i32) {
    %c0_i32 = arith.constant 0 : i32
    %c0_i32_0 = arith.constant 0 : i32
    return %arg0, %c0_i32 : i32, i32
  }
  func.func @transform_2(%arg0: i32) -> (i32, i32) {
    %c0_i32 = arith.constant 0 : i32
    %c0_i32_0 = arith.constant 0 : i32
    %c0_i32_1 = arith.constant 0 : i32
    return %c0_i32, %c0_i32_0 : i32, i32
  }
  func.func @transform_3(%arg0: i32) -> (i32, i32) {
    %c0_i32 = arith.constant 0 : i32
    %c0_i32_0 = arith.constant 0 : i32
    %c0_i32_1 = arith.constant 0 : i32
    return %c0_i32, %c0_i32_0 : i32, i32
  }
  func.func @transform_4(%arg0: i32) -> (i32, i32) {
    %c0_i32 = arith.constant 0 : i32
    %c0_i32_0 = arith.constant 0 : i32
    %c0_i32_1 = arith.constant 0 : i32
    return %c0_i32, %c0_i32_0 : i32, i32
  }
  func.func @transform_5(%arg0: i32) -> (i32, i32) {
    %c0_i32 = arith.constant 0 : i32
    %c0_i32_0 = arith.constant 0 : i32
    %c0_i32_1 = arith.constant 0 : i32
    return %c0_i32, %c0_i32_0 : i32, i32
  }
  func.func @transform_6(%arg0: i32) -> (i32, i32) {
    %c0_i32 = arith.constant 0 : i32
    %c0_i32_0 = arith.constant 0 : i32
    %c0_i32_1 = arith.constant 0 : i32
    return %c0_i32, %c0_i32_0 : i32, i32
  }
  func.func @transform_7(%arg0: i32) -> (i32, i32) {
    %c0_i32 = arith.constant 0 : i32
    %c0_i32_0 = arith.constant 0 : i32
    %c0_i32_1 = arith.constant 0 : i32
    return %c0_i32, %c0_i32_0 : i32, i32
  }
  func.func @transform_8(%arg0: i32) -> (i32, i32) {
    %c0_i32 = arith.constant 0 : i32
    %c0_i32_0 = arith.constant 0 : i32
    %c0_i32_1 = arith.constant 0 : i32
    return %c0_i32, %c0_i32_0 : i32, i32
  }
  func.func @transform_9(%arg0: i32) -> (i32, i32) {
    %c0_i32 = arith.constant 0 : i32
    %c0_i32_0 = arith.constant 0 : i32
    return %arg0, %c0_i32 : i32, i32
  }
}

module attributes {stable_mosaic.version = 11 : i64} {
  func.func @_critic_kernel(%arg0: i32, %arg1: memref<8x16xf32, #tpu.memory_space<vmem>>, %arg2: memref<8x8xf32, #tpu.memory_space<vmem>>, %arg3: memref<16x32xf32, #tpu.memory_space<vmem>>, %arg4: memref<8x32xf32, #tpu.memory_space<vmem>>, %arg5: memref<1x32xf32, #tpu.memory_space<vmem>>, %arg6: memref<32x32xf32, #tpu.memory_space<vmem>>, %arg7: memref<1x32xf32, #tpu.memory_space<vmem>>, %arg8: memref<1x32xf32, #tpu.memory_space<vmem>>, %arg9: memref<1x1xf32, #tpu.memory_space<smem>>, %arg10: memref<1x8xf32, #tpu.memory_space<vmem>>) attributes {dimension_semantics = [#tpu.dimension_semantics<parallel>], iteration_bounds = array<i64: 1>, scalar_prefetch = 0 : i64, scratch_operands = 0 : i64, tpu.core_type = #tpu.core_type<tc>, window_params = [{transform_indices = @transform_0, window_bounds = array<i64: 8, 16>}, {transform_indices = @transform_1, window_bounds = array<i64: 8, 8>}, {pipeline_mode = #tpu.pipeline_mode<synchronous>, transform_indices = @transform_2, window_bounds = array<i64: 16, 32>}, {pipeline_mode = #tpu.pipeline_mode<synchronous>, transform_indices = @transform_3, window_bounds = array<i64: 8, 32>}, {pipeline_mode = #tpu.pipeline_mode<synchronous>, transform_indices = @transform_4, window_bounds = array<i64: 1, 32>}, {pipeline_mode = #tpu.pipeline_mode<synchronous>, transform_indices = @transform_5, window_bounds = array<i64: 32, 32>}, {pipeline_mode = #tpu.pipeline_mode<synchronous>, transform_indices = @transform_6, window_bounds = array<i64: 1, 32>}, {pipeline_mode = #tpu.pipeline_mode<synchronous>, transform_indices = @transform_7, window_bounds = array<i64: 1, 32>}, {transform_indices = @transform_8, window_bounds = array<i64: 1, 1>}, {transform_indices = @transform_9, window_bounds = array<i64: 1, 8>}]} {
    %c0 = arith.constant 0 : index
    %c0_0 = arith.constant 0 : index
    %0 = vector.load %arg1[%c0, %c0_0] : memref<8x16xf32, #tpu.memory_space<vmem>>, vector<8x16xf32>
    %c0_1 = arith.constant 0 : index
    %c0_2 = arith.constant 0 : index
    %1 = vector.load %arg2[%c0_1, %c0_2] : memref<8x8xf32, #tpu.memory_space<vmem>>, vector<8x8xf32>
    %c0_3 = arith.constant 0 : index
    %c0_4 = arith.constant 0 : index
    %2 = vector.load %arg3[%c0_3, %c0_4] : memref<16x32xf32, #tpu.memory_space<vmem>>, vector<16x32xf32>
    %cst = arith.constant dense<0.000000e+00> : vector<8x32xf32>
    %3 = tpu.matmul %0, %2, %cst {dimension_numbers = #tpu.dot_dimension_numbers<[1], [0], [0], [1], [0, 0, 1, 1], [], []>} : vector<8x16xf32>, vector<16x32xf32>, vector<8x32xf32> -> vector<8x32xf32>
    %c0_5 = arith.constant 0 : index
    %c0_6 = arith.constant 0 : index
    %4 = vector.load %arg4[%c0_5, %c0_6] : memref<8x32xf32, #tpu.memory_space<vmem>>, vector<8x32xf32>
    %cst_7 = arith.constant dense<0.000000e+00> : vector<8x32xf32>
    %5 = tpu.matmul %1, %4, %cst_7 {dimension_numbers = #tpu.dot_dimension_numbers<[1], [0], [0], [1], [0, 0, 1, 1], [], []>} : vector<8x8xf32>, vector<8x32xf32>, vector<8x32xf32> -> vector<8x32xf32>
    %6 = arith.addf %3, %5 : vector<8x32xf32>
    %c0_8 = arith.constant 0 : index
    %c0_9 = arith.constant 0 : index
    %7 = vector.load %arg5[%c0_8, %c0_9] : memref<1x32xf32, #tpu.memory_space<vmem>>, vector<1x32xf32>
    %8 = vector.broadcast %7 : vector<1x32xf32> to vector<8x32xf32>
    %9 = arith.addf %6, %8 : vector<8x32xf32>
    %cst_10 = arith.constant 0.000000e+00 : f32
    %10 = vector.broadcast %cst_10 : f32 to vector<8x32xf32>
    %11 = arith.maximumf %9, %10 : vector<8x32xf32>
    %c0_11 = arith.constant 0 : index
    %c0_12 = arith.constant 0 : index
    %12 = vector.load %arg6[%c0_11, %c0_12] : memref<32x32xf32, #tpu.memory_space<vmem>>, vector<32x32xf32>
    %cst_13 = arith.constant dense<0.000000e+00> : vector<8x32xf32>
    %13 = tpu.matmul %11, %12, %cst_13 {dimension_numbers = #tpu.dot_dimension_numbers<[1], [0], [0], [1], [0, 0, 1, 1], [], []>} : vector<8x32xf32>, vector<32x32xf32>, vector<8x32xf32> -> vector<8x32xf32>
    %c0_14 = arith.constant 0 : index
    %c0_15 = arith.constant 0 : index
    %14 = vector.load %arg7[%c0_14, %c0_15] : memref<1x32xf32, #tpu.memory_space<vmem>>, vector<1x32xf32>
    %15 = vector.broadcast %14 : vector<1x32xf32> to vector<8x32xf32>
    %16 = arith.addf %13, %15 : vector<8x32xf32>
    %cst_16 = arith.constant 0.000000e+00 : f32
    %17 = vector.broadcast %cst_16 : f32 to vector<8x32xf32>
    %18 = arith.maximumf %16, %17 : vector<8x32xf32>
    %c0_17 = arith.constant 0 : index
    %c0_18 = arith.constant 0 : index
    %19 = vector.load %arg8[%c0_17, %c0_18] : memref<1x32xf32, #tpu.memory_space<vmem>>, vector<1x32xf32>
    %cst_19 = arith.constant dense<0.000000e+00> : vector<1x8xf32>
    %20 = tpu.matmul %19, %18, %cst_19 {dimension_numbers = #tpu.dot_dimension_numbers<[1], [1], [0], [0], [0, 0, 1, 0], [], []>} : vector<1x32xf32>, vector<8x32xf32>, vector<1x8xf32> -> vector<1x8xf32>
    %c0_20 = arith.constant 0 : index
    %c0_21 = arith.constant 0 : index
    %21 = memref.load %arg9[%c0_20, %c0_21] : memref<1x1xf32, #tpu.memory_space<smem>>
    %22 = vector.broadcast %21 : f32 to vector<1x8xf32>
    %23 = arith.addf %20, %22 : vector<1x8xf32>
    %c0_22 = arith.constant 0 : index
    %c0_23 = arith.constant 0 : index
    %24 = vector.load %arg10[%c0_22, %c0_23] : memref<1x8xf32, #tpu.memory_space<vmem>>, vector<1x8xf32>
    tpu.vector_store %arg10[%c0_22, %c0_23], %23 {strides = array<i32>} : memref<1x8xf32, #tpu.memory_space<vmem>>, vector<1x8xf32>,
    return
  }
  func.func @transform_0(%arg0: i32) -> (i32, i32) {
    %c0_i32 = arith.constant 0 : i32
    %c0_i32_0 = arith.constant 0 : i32
    return %arg0, %c0_i32 : i32, i32
  }
  func.func @transform_1(%arg0: i32) -> (i32, i32) {
    %c0_i32 = arith.constant 0 : i32
    %c0_i32_0 = arith.constant 0 : i32
    return %arg0, %c0_i32 : i32, i32
  }
  func.func @transform_2(%arg0: i32) -> (i32, i32) {
    %c0_i32 = arith.constant 0 : i32
    %c0_i32_0 = arith.constant 0 : i32
    %c0_i32_1 = arith.constant 0 : i32
    return %c0_i32, %c0_i32_0 : i32, i32
  }
  func.func @transform_3(%arg0: i32) -> (i32, i32) {
    %c0_i32 = arith.constant 0 : i32
    %c0_i32_0 = arith.constant 0 : i32
    %c0_i32_1 = arith.constant 0 : i32
    return %c0_i32, %c0_i32_0 : i32, i32
  }
  func.func @transform_4(%arg0: i32) -> (i32, i32) {
    %c0_i32 = arith.constant 0 : i32
    %c0_i32_0 = arith.constant 0 : i32
    %c0_i32_1 = arith.constant 0 : i32
    return %c0_i32, %c0_i32_0 : i32, i32
  }
  func.func @transform_5(%arg0: i32) -> (i32, i32) {
    %c0_i32 = arith.constant 0 : i32
    %c0_i32_0 = arith.constant 0 : i32
    %c0_i32_1 = arith.constant 0 : i32
    return %c0_i32, %c0_i32_0 : i32, i32
  }
  func.func @transform_6(%arg0: i32) -> (i32, i32) {
    %c0_i32 = arith.constant 0 : i32
    %c0_i32_0 = arith.constant 0 : i32
    %c0_i32_1 = arith.constant 0 : i32
    return %c0_i32, %c0_i32_0 : i32, i32
  }
  func.func @transform_7(%arg0: i32) -> (i32, i32) {
    %c0_i32 = arith.constant 0 : i32
    %c0_i32_0 = arith.constant 0 : i32
    %c0_i32_1 = arith.constant 0 : i32
    return %c0_i32, %c0_i32_0 : i32, i32
  }
  func.func @transform_8(%arg0: i32) -> (i32, i32) {
    %c0_i32 = arith.constant 0 : i32
    %c0_i32_0 = arith.constant 0 : i32
    %c0_i32_1 = arith.constant 0 : i32
    return %c0_i32, %c0_i32_0 : i32, i32
  }
  func.func @transform_9(%arg0: i32) -> (i32, i32) {
    %c0_i32 = arith.constant 0 : i32
    %c0_i32_0 = arith.constant 0 : i32
    return %arg0, %c0_i32 : i32, i32
  }
}

</mosaic_0001>

<llo_original>
// kernel: tpu_custom_call.1
$region0: #{tpu_custom_call.1}
  #allocation0 [shape = 'u32[]', space=smem, size = 0x4, offset = 0x4, fixed_abs, tag = 'smem constant byte address 0x4 - core index']
  #allocation1 [shape = 'u32[72,128]{1,0:T(1,128)}', space=vmem, size = 0x9000, scoped, tag = 'internal scratch']
  #allocation2 [shape = 'f32[1,1]{1,0:T(1,128)S(6)}', space=smem, size = 0x200, scoped, tag = 'scoped memory for tpu_custom_call.1']
  %s0 = inlined_call_operand.hbm [shape: f32[8,16], index: 0, kind: input, shape index: {}]
  %s1 = inlined_call_operand.hbm [shape: f32[8,8], index: 1, kind: input, shape index: {}]
  %s2 = inlined_call_operand.hbm [shape: f32[16,32], index: 2, kind: input, shape index: {}]
  %s3 = inlined_call_operand.hbm [shape: f32[8,32], index: 3, kind: input, shape index: {}]
  %s4 = inlined_call_operand.vmem [shape: f32[1,32], index: 4, kind: input, shape index: {}]
  %s5 = inlined_call_operand.hbm [shape: f32[32,32], index: 5, kind: input, shape index: {}]
  %s6 = inlined_call_operand.vmem [shape: f32[1,32], index: 6, kind: input, shape index: {}]
  %s7 = inlined_call_operand.vmem [shape: f32[1,32], index: 7, kind: input, shape index: {}]
  %s8 = inlined_call_operand.<no memory space> [shape: f32[1,1], index: 8, kind: input, shape index: {}]
  %s9 = inlined_call_operand.hbm [shape: f32[1,8], index: 9, kind: output, shape index: {}]
  %s10 = sld [smem:[#allocation0]]
  $region66: #{tpu_custom_call.1} parent=0
    _
  %s12 = ssub.s32 1, %s10
  %s13 = scalar_select 0, %s12, %s10
  %14 = sst [smem:[#allocation2]] %s8
  $region1: #{tpu_custom_call.1} parent=0
    #allocation3 [shape = 'u8[4096]{0}', space=vmem, size = 0x1000, scoped, tag = 'input window, operand 0, single buffered']
    #allocation4 [shape = 's32[1]{0}', space=sflag, size = 0x4, scoped, tag = 'scoped memory for tpu_custom_call.1']
    #allocation5 [shape = 's32[1]{0}', space=sflag, size = 0x4, scoped, tag = 'scoped memory for tpu_custom_call.1']
    #allocation6 [shape = 'u8[4096]{0}', space=vmem, size = 0x1000, scoped, tag = 'input window, operand 1, single buffered']
    #allocation7 [shape = 's32[1]{0}', space=sflag, size = 0x4, scoped, tag = 'scoped memory for tpu_custom_call.1']
    #allocation8 [shape = 'u8[8192]{0}', space=vmem, size = 0x2000, scoped, tag = 'input window, operand 2, single buffered']
    #allocation9 [shape = 'u8[4096]{0}', space=vmem, size = 0x1000, scoped, tag = 'input window, operand 3, single buffered']
    #allocation10 [shape = 's32[1]{0}', space=sflag, size = 0x4, scoped, tag = 'scoped memory for tpu_custom_call.1']
    #allocation11 [shape = 'u8[16384]{0}', space=vmem, size = 0x4000, scoped, tag = 'input window, operand 5, single buffered']
    #allocation12 [shape = 'u8[512]{0}', space=vmem, size = 0x400, scoped, tag = 'output window, operand 0, single buffered']
    %15 = vsyncpa [#allocation4], 0
    %16 = vsyncpa [#allocation7], 0
    %17 = vsyncpa [#allocation10], 0
    %18 = vsyncpa [#allocation5], 0
    // Predicated region
    $region2: #{tpu_custom_call.1} parent=1 // pred_check
      _
    $region3: #{tpu_custom_call.1} parent=1 // pred_check_branch
      %20 = sbr.rel (0) target = $region5
    $region4: #{tpu_custom_call.1} parent=1 // pred_region
      %22 = vsyncadd [#allocation4], 0
      %s24 = sshll.u32 %s0, 4
      %s25 = int_to_ptr.hbm [resolvable:$true] %s24
      %s26 = sshll.u32 [#allocation3], 4
      %s27 = int_to_ptr.vmem [resolvable:$true] %s26
      %29 = dma.hbm_to_vmem [thread:$0]  %s25, 128, %s27, [#allocation4]
    $region5: #{tpu_custom_call.1} parent=1 // pred_fallthru
      _
    // Predicated region
    $region6: #{tpu_custom_call.1} parent=1 // pred_check
      _
    $region7: #{tpu_custom_call.1} parent=1 // pred_check_branch
      %31 = sbr.rel (0) target = $region9
    $region8: #{tpu_custom_call.1} parent=1 // pred_region
      %33 = vsyncadd [#allocation7], 0
      %s35 = sshll.u32 %s1, 4
      %s36 = int_to_ptr.hbm [resolvable:$true] %s35
      %s37 = sshll.u32 [#allocation6], 4
      %s38 = int_to_ptr.vmem [resolvable:$true] %s37
      %40 = dma.hbm_to_vmem [thread:$0]  %s36, 128, %s38, [#allocation7]
    $region9: #{tpu_custom_call.1} parent=1 // pred_fallthru
      _
    // Predicated region
    $region10: #{tpu_custom_call.1} parent=1 // pred_check
      _
    $region11: #{tpu_custom_call.1} parent=1 // pred_check_branch
      %42 = sbr.rel (0) target = $region13
    $region12: #{tpu_custom_call.1} parent=1 // pred_region
      %44 = vsyncadd [#allocation7], 0
      %s45 = sshll.u32 %s2, 4
      %s46 = int_to_ptr.hbm [resolvable:$true] %s45
      %s47 = sshll.u32 [#allocation8], 4
      %s48 = int_to_ptr.vmem [resolvable:$true] %s47
      %53 = dma.hbm_to_vmem [thread:$0]  %s46, 256, %s48, [#allocation7], 128, 128, 8
    $region13: #{tpu_custom_call.1} parent=1 // pred_fallthru
      _
    // Predicated region
    $region14: #{tpu_custom_call.1} parent=1 // pred_check
      _
    $region15: #{tpu_custom_call.1} parent=1 // pred_check_branch
      %55 = sbr.rel (0) target = $region17
    $region16: #{tpu_custom_call.1} parent=1 // pred_region
      %57 = vsyncadd [#allocation10], 0
      %s59 = sshll.u32 %s3, 4
      %s60 = int_to_ptr.hbm [resolvable:$true] %s59
      %s61 = sshll.u32 [#allocation9], 4
      %s62 = int_to_ptr.vmem [resolvable:$true] %s61
      %64 = dma.hbm_to_vmem [thread:$0]  %s60, 128, %s62, [#allocation10]
    $region17: #{tpu_custom_call.1} parent=1 // pred_fallthru
      _
    // Predicated region
    $region18: #{tpu_custom_call.1} parent=1 // pred_check
      _
    $region19: #{tpu_custom_call.1} parent=1 // pred_check_branch
      %66 = sbr.rel (0) target = $region21
    $region20: #{tpu_custom_call.1} parent=1 // pred_region
      _
    $region21: #{tpu_custom_call.1} parent=1 // pred_fallthru
      _
    // Predicated region
    $region22: #{tpu_custom_call.1} parent=1 // pred_check
      _
    $region23: #{tpu_custom_call.1} parent=1 // pred_check_branch
      %68 = sbr.rel (0) target = $region25
    $region24: #{tpu_custom_call.1} parent=1 // pred_region
      %70 = vsyncadd [#allocation10], 0
      %s71 = sshll.u32 %s5, 4
      %s72 = int_to_ptr.hbm [resolvable:$true] %s71
      %s73 = sshll.u32 [#allocation11], 4
      %s74 = int_to_ptr.vmem [resolvable:$true] %s73
      %79 = dma.hbm_to_vmem [thread:$0]  %s72, 512, %s74, [#allocation10], 128, 128, 8
    $region25: #{tpu_custom_call.1} parent=1 // pred_fallthru
      _
    // Predicated region
    $region26: #{tpu_custom_call.1} parent=1 // pred_check
      _
    $region27: #{tpu_custom_call.1} parent=1 // pred_check_branch
      %81 = sbr.rel (0) target = $region29
    $region28: #{tpu_custom_call.1} parent=1 // pred_region
      _
    $region29: #{tpu_custom_call.1} parent=1 // pred_fallthru
      _
    // Predicated region
    $region30: #{tpu_custom_call.1} parent=1 // pred_check
      _
    $region31: #{tpu_custom_call.1} parent=1 // pred_check_branch
      %83 = sbr.rel (0) target = $region33
    $region32: #{tpu_custom_call.1} parent=1 // pred_region
      _
    $region33: #{tpu_custom_call.1} parent=1 // pred_fallthru
      _
    // Predicated region
    $region34: #{tpu_custom_call.1} parent=1 // pred_check
      _
    $region35: #{tpu_custom_call.1} parent=1 // pred_check_branch
      %85 = sbr.rel (0) target = $region37
    $region36: #{tpu_custom_call.1} parent=1 // pred_region
      _
    $region37: #{tpu_custom_call.1} parent=1 // pred_fallthru
      _
    // Predicated region
    $region38: #{tpu_custom_call.1} parent=1 // pred_check
      _
    $region39: #{tpu_custom_call.1} parent=1 // pred_check_branch
      %87 = sbr.rel (0) target = $region41
    $region40: #{tpu_custom_call.1} parent=1 // pred_region
      %89 = dma.done [#allocation4], 128
    $region41: #{tpu_custom_call.1} parent=1 // pred_fallthru
      _
    // Predicated region
    $region42: #{tpu_custom_call.1} parent=1 // pred_check
      _
    $region43: #{tpu_custom_call.1} parent=1 // pred_check_branch
      %91 = sbr.rel (0) target = $region45
    $region44: #{tpu_custom_call.1} parent=1 // pred_region
      %93 = dma.done [#allocation7], 128
    $region45: #{tpu_custom_call.1} parent=1 // pred_fallthru
      _
    // Predicated region
    $region46: #{tpu_custom_call.1} parent=1 // pred_check
      _
    $region47: #{tpu_custom_call.1} parent=1 // pred_check_branch
      %95 = sbr.rel (0) target = $region49
    $region48: #{tpu_custom_call.1} parent=1 // pred_region
      %97 = dma.done [#allocation7], 256
    $region49: #{tpu_custom_call.1} parent=1 // pred_fallthru
      _
    // Predicated region
    $region50: #{tpu_custom_call.1} parent=1 // pred_check
      _
    $region51: #{tpu_custom_call.1} parent=1 // pred_check_branch
      %99 = sbr.rel (0) target = $region53
    $region52: #{tpu_custom_call.1} parent=1 // pred_region
      %101 = dma.done [#allocation10], 128
    $region53: #{tpu_custom_call.1} parent=1 // pred_fallthru
      _
    // Predicated region
    $region54: #{tpu_custom_call.1} parent=1 // pred_check
      _
    $region55: #{tpu_custom_call.1} parent=1 // pred_check_branch
      %103 = sbr.rel (0) target = $region57
    $region56: #{tpu_custom_call.1} parent=1 // pred_region
      %105 = dma.done [#allocation10], 512
    $region57: #{tpu_custom_call.1} parent=1 // pred_fallthru
      _
    %v106 = vld [vmem:[#allocation3] sm:$0xff]
    %v107 = vld [vmem:[#allocation6] sm:$0xff]
    %v108 = vld [vmem:[#allocation8] sm:$0xff]
    %v109 = vld [vmem:[#allocation8 + $0x8] sm:$0xff]
    %v110 = vld [vmem:[#allocation9] sm:$0xff]
    %vm111 = vcmask 64512
    %v113 = vsel %vm111, %v107, 0
    %115 = vmatpush.msra.mxu0 0.0
    %116 = vmatpush.msra.mxu0 0.0
    %117 = vmatpush.msra.mxu0 0.0
    %118 = vmatpush.msra.mxu0 0.0
    %119 = vmatpush.msra.mxu0 0.0
    %120 = vmatpush.msra.mxu0 0.0
    %121 = vmatpush.msra.mxu0 0.0
    %122 = vmatpush.msra.mxu0 0.0
    %123 = vmatpush.msra.mxu0 0.0
    %124 = vmatpush.msra.mxu0 0.0
    %125 = vmatpush.msra.mxu0 0.0
    %126 = vmatpush.msra.mxu0 0.0
    %127 = vmatpush.msra.mxu0 0.0
    %128 = vmatpush.msra.mxu0 0.0
    %129 = vmatpush.msra.mxu0 0.0
    %130 = vmatpush.msra.mxu0 %v110
    %131 = vmatmul.f32.gmra.mxu0 %v113
    %v132 = vpop.f32.mrf.mxu0
    %v133 = vadd.f32 0.0, %v132
    %134 = vdwg.mxu0
    %vm135 = vcmask 130048
    %v137 = vsel %vm135, %v106, 0
    %139 = vmatpush.msra.mxu0 0.0
    %140 = vmatpush.msra.mxu0 0.0
    %141 = vmatpush.msra.mxu0 0.0
    %142 = vmatpush.msra.mxu0 0.0
    %143 = vmatpush.msra.mxu0 0.0
    %144 = vmatpush.msra.mxu0 0.0
    %145 = vmatpush.msra.mxu0 0.0
    %146 = vmatpush.msra.mxu0 0.0
    %147 = vmatpush.msra.mxu0 0.0
    %148 = vmatpush.msra.mxu0 0.0
    %149 = vmatpush.msra.mxu0 0.0
    %150 = vmatpush.msra.mxu0 0.0
    %151 = vmatpush.msra.mxu0 0.0
    %152 = vmatpush.msra.mxu0 0.0
    %153 = vmatpush.msra.mxu0 %v109
    %154 = vmatpush.msra.mxu0 %v108
    %155 = vmatmul.f32.gmra.mxu0 %v137
    %v156 = vpop.f32.mrf.mxu0
    %v157 = vadd.f32 %v133, %v156
    %158 = vdwg.mxu0
    %v159 = vld [vmem:[%s4] sm:$0x1]
    %v161 = vperm.slane %v159, 0
    %v163 = vadd.f32 %v157, %v161
    %v164 = vmax.f32 %v163, 0.0
    %v165 = vld [vmem:[#allocation11] sm:$0xff]
    %v166 = vld [vmem:[#allocation11 + $0x8] sm:$0xff]
    %v167 = vld [vmem:[#allocation11 + $0x10] sm:$0xff]
    %v168 = vld [vmem:[#allocation11 + $0x18] sm:$0xff]
    %v169 = vld [vmem:[%s6] sm:$0x1]
    %v171 = vperm.slane %v169, 0
    %vm173 = vcmask 261120
    %v175 = vsel %vm173, %v164, 0
    %177 = vmatpush.msra.mxu0 0.0
    %178 = vmatpush.msra.mxu0 0.0
    %179 = vmatpush.msra.mxu0 0.0
    %180 = vmatpush.msra.mxu0 0.0
    %181 = vmatpush.msra.mxu0 0.0
    %182 = vmatpush.msra.mxu0 0.0
    %183 = vmatpush.msra.mxu0 0.0
    %184 = vmatpush.msra.mxu0 0.0
    %185 = vmatpush.msra.mxu0 0.0
    %186 = vmatpush.msra.mxu0 0.0
    %187 = vmatpush.msra.mxu0 0.0
    %188 = vmatpush.msra.mxu0 0.0
    %189 = vmatpush.msra.mxu0 %v168
    %190 = vmatpush.msra.mxu0 %v167
    %191 = vmatpush.msra.mxu0 %v166
    %192 = vmatpush.msra.mxu0 %v165
    %193 = vmatmul.f32.gmra.mxu0 %v175
    %v194 = vpop.f32.mrf.mxu0
    %v195 = vadd.f32 %v171, %v194
    %196 = vdwg.mxu0
    %v197 = vmax.f32 %v195, 0.0
    %v198 = vld [vmem:[%s7] sm:$0x1]
    %s199 = sld [smem:[#allocation2]]
    %v200 = vstv %s199
    %v202 = vsel %vm173, %v198, 0
    %v205 = vsel %vm173, %v197, 0
    %207 = vmatpush.xpose.msra.mxu0 0.0
    %208 = vmatpush.xpose.msra.mxu0 0.0
    %209 = vmatpush.xpose.msra.mxu0 0.0
    %210 = vmatpush.xpose.msra.mxu0 0.0
    %211 = vmatpush.xpose.msra.mxu0 0.0
    %212 = vmatpush.xpose.msra.mxu0 0.0
    %213 = vmatpush.xpose.msra.mxu0 0.0
    %214 = vmatpush.xpose.msra.mxu0 0.0
    %215 = vmatpush.xpose.msra.mxu0 0.0
    %216 = vmatpush.xpose.msra.mxu0 0.0
    %217 = vmatpush.xpose.msra.mxu0 0.0
    %218 = vmatpush.xpose.msra.mxu0 0.0
    %219 = vmatpush.xpose.msra.mxu0 0.0
    %220 = vmatpush.xpose.msra.mxu0 0.0
    %221 = vmatpush.xpose.msra.mxu0 0.0
    %222 = vmatpush.xpose.msra.mxu0 %v205
    %223 = vmatmul.f32.gmra.mxu0 %v202
    %v224 = vpop.f32.mrf.mxu0
    %v225 = vadd.f32 %v200, %v224
    %226 = vdwg.mxu0
    %vm227 = vcmask 57344
    %228 = vst.msk [vmem:[#allocation12] sm:$0x1] %vm227, %v225
    // Predicated region
    $region58: #{tpu_custom_call.1} parent=1 // pred_check
      _
    $region59: #{tpu_custom_call.1} parent=1 // pred_check_branch
      %230 = sbr.rel (0) target = $region61
    $region60: #{tpu_custom_call.1} parent=1 // pred_region
      %232 = vsyncadd [#allocation5], 0
      %s234 = sshll.u32 [#allocation12], 4
      %s235 = int_to_ptr.vmem [resolvable:$true] %s234
      %s236 = sshll.u32 %s9, 4
      %s237 = int_to_ptr.hbm [resolvable:$true] %s236
      %239 = dma.vmem_to_hbm [thread:$0]  %s235, 16, %s237, [#allocation5]
    $region61: #{tpu_custom_call.1} parent=1 // pred_fallthru
      _
    // Predicated region
    $region62: #{tpu_custom_call.1} parent=1 // pred_check
      _
    $region63: #{tpu_custom_call.1} parent=1 // pred_check_branch
      %241 = sbr.rel (0) target = $region65
    $region64: #{tpu_custom_call.1} parent=1 // pred_region
      %243 = dma.done [#allocation5], 16
    $region65: #{tpu_custom_call.1} parent=1 // pred_fallthru
      _
    %244 = vsyncpa [#allocation4], 1
    %245 = vsyncpa [#allocation7], 1
    %246 = vsyncpa [#allocation10], 1
    %247 = vsyncpa [#allocation5], 1

// kernel: tpu_custom_call.1
$region0: #{tpu_custom_call.1}
  #allocation0 [shape = 'u32[]', space=smem, size = 0x4, offset = 0x4, fixed_abs, tag = 'smem constant byte address 0x4 - core index']
  #allocation1 [shape = 'u32[72,128]{1,0:T(1,128)}', space=vmem, size = 0x9000, scoped, tag = 'internal scratch']
  #allocation2 [shape = 'f32[1,1]{1,0:T(1,128)S(6)}', space=smem, size = 0x200, scoped, tag = 'scoped memory for tpu_custom_call.1']
  %s0 = inlined_call_operand.hbm [shape: f32[8,16], index: 0, kind: input, shape index: {}]
  %s1 = inlined_call_operand.hbm [shape: f32[8,8], index: 1, kind: input, shape index: {}]
  %s2 = inlined_call_operand.hbm [shape: f32[16,32], index: 2, kind: input, shape index: {}]
  %s3 = inlined_call_operand.hbm [shape: f32[8,32], index: 3, kind: input, shape index: {}]
  %s4 = inlined_call_operand.vmem [shape: f32[1,32], index: 4, kind: input, shape index: {}]
  %s5 = inlined_call_operand.hbm [shape: f32[32,32], index: 5, kind: input, shape index: {}]
  %s6 = inlined_call_operand.vmem [shape: f32[1,32], index: 6, kind: input, shape index: {}]
  %s7 = inlined_call_operand.vmem [shape: f32[1,32], index: 7, kind: input, shape index: {}]
  %s8 = inlined_call_operand.<no memory space> [shape: f32[1,1], index: 8, kind: input, shape index: {}]
  %s9 = inlined_call_operand.hbm [shape: f32[1,8], index: 9, kind: output, shape index: {}]
  %s10 = sld [smem:[#allocation0]]
  $region66: #{tpu_custom_call.1} parent=0
    _
  %s12 = ssub.s32 1, %s10
  %s13 = scalar_select 0, %s12, %s10
  %14 = sst [smem:[#allocation2]] %s8
  $region1: #{tpu_custom_call.1} parent=0
    #allocation3 [shape = 'u8[4096]{0}', space=vmem, size = 0x1000, scoped, tag = 'input window, operand 0, single buffered']
    #allocation4 [shape = 's32[1]{0}', space=sflag, size = 0x4, scoped, tag = 'scoped memory for tpu_custom_call.1']
    #allocation5 [shape = 's32[1]{0}', space=sflag, size = 0x4, scoped, tag = 'scoped memory for tpu_custom_call.1']
    #allocation6 [shape = 'u8[4096]{0}', space=vmem, size = 0x1000, scoped, tag = 'input window, operand 1, single buffered']
    #allocation7 [shape = 's32[1]{0}', space=sflag, size = 0x4, scoped, tag = 'scoped memory for tpu_custom_call.1']
    #allocation8 [shape = 'u8[8192]{0}', space=vmem, size = 0x2000, scoped, tag = 'input window, operand 2, single buffered']
    #allocation9 [shape = 'u8[4096]{0}', space=vmem, size = 0x1000, scoped, tag = 'input window, operand 3, single buffered']
    #allocation10 [shape = 's32[1]{0}', space=sflag, size = 0x4, scoped, tag = 'scoped memory for tpu_custom_call.1']
    #allocation11 [shape = 'u8[16384]{0}', space=vmem, size = 0x4000, scoped, tag = 'input window, operand 5, single buffered']
    #allocation12 [shape = 'u8[512]{0}', space=vmem, size = 0x400, scoped, tag = 'output window, operand 0, single buffered']
    %15 = vsyncpa [#allocation4], 0
    %16 = vsyncpa [#allocation7], 0
    %17 = vsyncpa [#allocation10], 0
    %18 = vsyncpa [#allocation5], 0
    // Predicated region
    $region2: #{tpu_custom_call.1} parent=1 // pred_check
      _
    $region3: #{tpu_custom_call.1} parent=1 // pred_check_branch
      %20 = sbr.rel (0) target = $region5
    $region4: #{tpu_custom_call.1} parent=1 // pred_region
      %22 = vsyncadd [#allocation4], 0
      %s24 = sshll.u32 %s0, 4
      %s25 = int_to_ptr.hbm [resolvable:$true] %s24
      %s26 = sshll.u32 [#allocation3], 4
      %s27 = int_to_ptr.vmem [resolvable:$true] %s26
      %29 = dma.hbm_to_vmem [thread:$0]  %s25, 128, %s27, [#allocation4]
    $region5: #{tpu_custom_call.1} parent=1 // pred_fallthru
      _
    // Predicated region
    $region6: #{tpu_custom_call.1} parent=1 // pred_check
      _
    $region7: #{tpu_custom_call.1} parent=1 // pred_check_branch
      %31 = sbr.rel (0) target = $region9
    $region8: #{tpu_custom_call.1} parent=1 // pred_region
      %33 = vsyncadd [#allocation7], 0
      %s35 = sshll.u32 %s1, 4
      %s36 = int_to_ptr.hbm [resolvable:$true] %s35
      %s37 = sshll.u32 [#allocation6], 4
      %s38 = int_to_ptr.vmem [resolvable:$true] %s37
      %40 = dma.hbm_to_vmem [thread:$0]  %s36, 128, %s38, [#allocation7]
    $region9: #{tpu_custom_call.1} parent=1 // pred_fallthru
      _
    // Predicated region
    $region10: #{tpu_custom_call.1} parent=1 // pred_check
      _
    $region11: #{tpu_custom_call.1} parent=1 // pred_check_branch
      %42 = sbr.rel (0) target = $region13
    $region12: #{tpu_custom_call.1} parent=1 // pred_region
      %44 = vsyncadd [#allocation7], 0
      %s45 = sshll.u32 %s2, 4
      %s46 = int_to_ptr.hbm [resolvable:$true] %s45
      %s47 = sshll.u32 [#allocation8], 4
      %s48 = int_to_ptr.vmem [resolvable:$true] %s47
      %53 = dma.hbm_to_vmem [thread:$0]  %s46, 256, %s48, [#allocation7], 128, 128, 8
    $region13: #{tpu_custom_call.1} parent=1 // pred_fallthru
      _
    // Predicated region
    $region14: #{tpu_custom_call.1} parent=1 // pred_check
      _
    $region15: #{tpu_custom_call.1} parent=1 // pred_check_branch
      %55 = sbr.rel (0) target = $region17
    $region16: #{tpu_custom_call.1} parent=1 // pred_region
      %57 = vsyncadd [#allocation10], 0
      %s59 = sshll.u32 %s3, 4
      %s60 = int_to_ptr.hbm [resolvable:$true] %s59
      %s61 = sshll.u32 [#allocation9], 4
      %s62 = int_to_ptr.vmem [resolvable:$true] %s61
      %64 = dma.hbm_to_vmem [thread:$0]  %s60, 128, %s62, [#allocation10]
    $region17: #{tpu_custom_call.1} parent=1 // pred_fallthru
      _
    // Predicated region
    $region18: #{tpu_custom_call.1} parent=1 // pred_check
      _
    $region19: #{tpu_custom_call.1} parent=1 // pred_check_branch
      %66 = sbr.rel (0) target = $region21
    $region20: #{tpu_custom_call.1} parent=1 // pred_region
      _
    $region21: #{tpu_custom_call.1} parent=1 // pred_fallthru
      _
    // Predicated region
    $region22: #{tpu_custom_call.1} parent=1 // pred_check
      _
    $region23: #{tpu_custom_call.1} parent=1 // pred_check_branch
      %68 = sbr.rel (0) target = $region25
    $region24: #{tpu_custom_call.1} parent=1 // pred_region
      %70 = vsyncadd [#allocation10], 0
      %s71 = sshll.u32 %s5, 4
      %s72 = int_to_ptr.hbm [resolvable:$true] %s71
      %s73 = sshll.u32 [#allocation11], 4
      %s74 = int_to_ptr.vmem [resolvable:$true] %s73
      %79 = dma.hbm_to_vmem [thread:$0]  %s72, 512, %s74, [#allocation10], 128, 128, 8
    $region25: #{tpu_custom_call.1} parent=1 // pred_fallthru
      _
    // Predicated region
    $region26: #{tpu_custom_call.1} parent=1 // pred_check
      _
    $region27: #{tpu_custom_call.1} parent=1 // pred_check_branch
      %81 = sbr.rel (0) target = $region29
    $region28: #{tpu_custom_call.1} parent=1 // pred_region
      _
    $region29: #{tpu_custom_call.1} parent=1 // pred_fallthru
      _
    // Predicated region
    $region30: #{tpu_custom_call.1} parent=1 // pred_check
      _
    $region31: #{tpu_custom_call.1} parent=1 // pred_check_branch
      %83 = sbr.rel (0) target = $region33
    $region32: #{tpu_custom_call.1} parent=1 // pred_region
      _
    $region33: #{tpu_custom_call.1} parent=1 // pred_fallthru
      _
    // Predicated region
    $region34: #{tpu_custom_call.1} parent=1 // pred_check
      _
    $region35: #{tpu_custom_call.1} parent=1 // pred_check_branch
      %85 = sbr.rel (0) target = $region37
    $region36: #{tpu_custom_call.1} parent=1 // pred_region
      _
    $region37: #{tpu_custom_call.1} parent=1 // pred_fallthru
      _
    // Predicated region
    $region38: #{tpu_custom_call.1} parent=1 // pred_check
      _
    $region39: #{tpu_custom_call.1} parent=1 // pred_check_branch
      %87 = sbr.rel (0) target = $region41
    $region40: #{tpu_custom_call.1} parent=1 // pred_region
      %89 = dma.done [#allocation4], 128
    $region41: #{tpu_custom_call.1} parent=1 // pred_fallthru
      _
    // Predicated region
    $region42: #{tpu_custom_call.1} parent=1 // pred_check
      _
    $region43: #{tpu_custom_call.1} parent=1 // pred_check_branch
      %91 = sbr.rel (0) target = $region45
    $region44: #{tpu_custom_call.1} parent=1 // pred_region
      %93 = dma.done [#allocation7], 128
    $region45: #{tpu_custom_call.1} parent=1 // pred_fallthru
      _
    // Predicated region
    $region46: #{tpu_custom_call.1} parent=1 // pred_check
      _
    $region47: #{tpu_custom_call.1} parent=1 // pred_check_branch
      %95 = sbr.rel (0) target = $region49
    $region48: #{tpu_custom_call.1} parent=1 // pred_region
      %97 = dma.done [#allocation7], 256
    $region49: #{tpu_custom_call.1} parent=1 // pred_fallthru
      _
    // Predicated region
    $region50: #{tpu_custom_call.1} parent=1 // pred_check
      _
    $region51: #{tpu_custom_call.1} parent=1 // pred_check_branch
      %99 = sbr.rel (0) target = $region53
    $region52: #{tpu_custom_call.1} parent=1 // pred_region
      %101 = dma.done [#allocation10], 128
    $region53: #{tpu_custom_call.1} parent=1 // pred_fallthru
      _
    // Predicated region
    $region54: #{tpu_custom_call.1} parent=1 // pred_check
      _
    $region55: #{tpu_custom_call.1} parent=1 // pred_check_branch
      %103 = sbr.rel (0) target = $region57
    $region56: #{tpu_custom_call.1} parent=1 // pred_region
      %105 = dma.done [#allocation10], 512
    $region57: #{tpu_custom_call.1} parent=1 // pred_fallthru
      _
    %v106 = vld [vmem:[#allocation3] sm:$0xff]
    %v107 = vld [vmem:[#allocation6] sm:$0xff]
    %v108 = vld [vmem:[#allocation8] sm:$0xff]
    %v109 = vld [vmem:[#allocation8 + $0x8] sm:$0xff]
    %v110 = vld [vmem:[#allocation9] sm:$0xff]
    %vm111 = vcmask 64512
    %v113 = vsel %vm111, %v107, 0
    %115 = vmatpush.msra.mxu0 0.0
    %116 = vmatpush.msra.mxu0 0.0
    %117 = vmatpush.msra.mxu0 0.0
    %118 = vmatpush.msra.mxu0 0.0
    %119 = vmatpush.msra.mxu0 0.0
    %120 = vmatpush.msra.mxu0 0.0
    %121 = vmatpush.msra.mxu0 0.0
    %122 = vmatpush.msra.mxu0 0.0
    %123 = vmatpush.msra.mxu0 0.0
    %124 = vmatpush.msra.mxu0 0.0
    %125 = vmatpush.msra.mxu0 0.0
    %126 = vmatpush.msra.mxu0 0.0
    %127 = vmatpush.msra.mxu0 0.0
    %128 = vmatpush.msra.mxu0 0.0
    %129 = vmatpush.msra.mxu0 0.0
    %130 = vmatpush.msra.mxu0 %v110
    %131 = vmatmul.f32.gmra.mxu0 %v113
    %v132 = vpop.f32.mrf.mxu0
    %v133 = vadd.f32 0.0, %v132
    %134 = vdwg.mxu0
    %vm135 = vcmask 130048
    %v137 = vsel %vm135, %v106, 0
    %139 = vmatpush.msra.mxu0 0.0
    %140 = vmatpush.msra.mxu0 0.0
    %141 = vmatpush.msra.mxu0 0.0
    %142 = vmatpush.msra.mxu0 0.0
    %143 = vmatpush.msra.mxu0 0.0
    %144 = vmatpush.msra.mxu0 0.0
    %145 = vmatpush.msra.mxu0 0.0
    %146 = vmatpush.msra.mxu0 0.0
    %147 = vmatpush.msra.mxu0 0.0
    %148 = vmatpush.msra.mxu0 0.0
    %149 = vmatpush.msra.mxu0 0.0
    %150 = vmatpush.msra.mxu0 0.0
    %151 = vmatpush.msra.mxu0 0.0
    %152 = vmatpush.msra.mxu0 0.0
    %153 = vmatpush.msra.mxu0 %v109
    %154 = vmatpush.msra.mxu0 %v108
    %155 = vmatmul.f32.gmra.mxu0 %v137
    %v156 = vpop.f32.mrf.mxu0
    %v157 = vadd.f32 %v133, %v156
    %158 = vdwg.mxu0
    %v159 = vld [vmem:[%s4] sm:$0x1]
    %v161 = vperm.slane %v159, 0
    %v163 = vadd.f32 %v157, %v161
    %v164 = vmax.f32 %v163, 0.0
    %v165 = vld [vmem:[#allocation11] sm:$0xff]
    %v166 = vld [vmem:[#allocation11 + $0x8] sm:$0xff]
    %v167 = vld [vmem:[#allocation11 + $0x10] sm:$0xff]
    %v168 = vld [vmem:[#allocation11 + $0x18] sm:$0xff]
    %v169 = vld [vmem:[%s6] sm:$0x1]
    %v171 = vperm.slane %v169, 0
    %vm173 = vcmask 261120
    %v175 = vsel %vm173, %v164, 0
    %177 = vmatpush.msra.mxu0 0.0
    %178 = vmatpush.msra.mxu0 0.0
    %179 = vmatpush.msra.mxu0 0.0
    %180 = vmatpush.msra.mxu0 0.0
    %181 = vmatpush.msra.mxu0 0.0
    %182 = vmatpush.msra.mxu0 0.0
    %183 = vmatpush.msra.mxu0 0.0
    %184 = vmatpush.msra.mxu0 0.0
    %185 = vmatpush.msra.mxu0 0.0
    %186 = vmatpush.msra.mxu0 0.0
    %187 = vmatpush.msra.mxu0 0.0
    %188 = vmatpush.msra.mxu0 0.0
    %189 = vmatpush.msra.mxu0 %v168
    %190 = vmatpush.msra.mxu0 %v167
    %191 = vmatpush.msra.mxu0 %v166
    %192 = vmatpush.msra.mxu0 %v165
    %193 = vmatmul.f32.gmra.mxu0 %v175
    %v194 = vpop.f32.mrf.mxu0
    %v195 = vadd.f32 %v171, %v194
    %196 = vdwg.mxu0
    %v197 = vmax.f32 %v195, 0.0
    %v198 = vld [vmem:[%s7] sm:$0x1]
    %s199 = sld [smem:[#allocation2]]
    %v200 = vstv %s199
    %v202 = vsel %vm173, %v198, 0
    %v205 = vsel %vm173, %v197, 0
    %207 = vmatpush.xpose.msra.mxu0 0.0
    %208 = vmatpush.xpose.msra.mxu0 0.0
    %209 = vmatpush.xpose.msra.mxu0 0.0
    %210 = vmatpush.xpose.msra.mxu0 0.0
    %211 = vmatpush.xpose.msra.mxu0 0.0
    %212 = vmatpush.xpose.msra.mxu0 0.0
    %213 = vmatpush.xpose.msra.mxu0 0.0
    %214 = vmatpush.xpose.msra.mxu0 0.0
    %215 = vmatpush.xpose.msra.mxu0 0.0
    %216 = vmatpush.xpose.msra.mxu0 0.0
    %217 = vmatpush.xpose.msra.mxu0 0.0
    %218 = vmatpush.xpose.msra.mxu0 0.0
    %219 = vmatpush.xpose.msra.mxu0 0.0
    %220 = vmatpush.xpose.msra.mxu0 0.0
    %221 = vmatpush.xpose.msra.mxu0 0.0
    %222 = vmatpush.xpose.msra.mxu0 %v205
    %223 = vmatmul.f32.gmra.mxu0 %v202
    %v224 = vpop.f32.mrf.mxu0
    %v225 = vadd.f32 %v200, %v224
    %226 = vdwg.mxu0
    %vm227 = vcmask 57344
    %228 = vst.msk [vmem:[#allocation12] sm:$0x1] %vm227, %v225
    // Predicated region
    $region58: #{tpu_custom_call.1} parent=1 // pred_check
      _
    $region59: #{tpu_custom_call.1} parent=1 // pred_check_branch
      %230 = sbr.rel (0) target = $region61
    $region60: #{tpu_custom_call.1} parent=1 // pred_region
      %232 = vsyncadd [#allocation5], 0
      %s234 = sshll.u32 [#allocation12], 4
      %s235 = int_to_ptr.vmem [resolvable:$true] %s234
      %s236 = sshll.u32 %s9, 4
      %s237 = int_to_ptr.hbm [resolvable:$true] %s236
      %239 = dma.vmem_to_hbm [thread:$0]  %s235, 16, %s237, [#allocation5]
    $region61: #{tpu_custom_call.1} parent=1 // pred_fallthru
      _
    // Predicated region
    $region62: #{tpu_custom_call.1} parent=1 // pred_check
      _
    $region63: #{tpu_custom_call.1} parent=1 // pred_check_branch
      %241 = sbr.rel (0) target = $region65
    $region64: #{tpu_custom_call.1} parent=1 // pred_region
      %243 = dma.done [#allocation5], 16
    $region65: #{tpu_custom_call.1} parent=1 // pred_fallthru
      _
    %244 = vsyncpa [#allocation4], 1
    %245 = vsyncpa [#allocation7], 1
    %246 = vsyncpa [#allocation10], 1
    %247 = vsyncpa [#allocation5], 1

</llo_original>
